<compile_context>
chip_gen: v5e
topology: v5e:2x2
jax: 0.10.0
libtpu: 0.0.40
codegen_flags: <defaults>
</compile_context>

<pallas_src>
import functools
import math

import jax
import jax.numpy as jnp
from jax.experimental import pallas as pl
from jax.experimental.pallas import tpu as pltpu

NEG_SLOPE = 0.01   # F.leaky_relu default
BN_EPS = 1e-5
COEFF = 3.0
TEMP = 1.0
NUM_CLASSES = 10


def _round_up(x, m):
    return ((x + m - 1) // m) * m


def _l2n(x, eps=1e-12):
    return x / (jnp.linalg.norm(x) + eps)


# ---------------------------------------------------------------------------
# Pallas kernels
# ---------------------------------------------------------------------------

def _mm_bn_kernel(a_ref, b_ref, s_ref, c_ref, o_ref, *, act):
    """o = [leaky_relu](A @ B * scale + bias); bf16 operands, f32 accumulate/epilogue."""
    acc = jnp.dot(a_ref[...], b_ref[...], preferred_element_type=jnp.float32)
    y = acc * s_ref[...] + c_ref[...]
    if act:
        y = jnp.where(y >= 0.0, y, NEG_SLOPE * y)
    o_ref[...] = y.astype(o_ref.dtype)


def _mm_bn_res_kernel(a_ref, b_ref, s_ref, c_ref, r_ref, o_ref, *, act):
    """o = [leaky_relu](A @ B * scale + bias + residual)."""
    acc = jnp.dot(a_ref[...], b_ref[...], preferred_element_type=jnp.float32)
    y = acc * s_ref[...] + c_ref[...] + r_ref[...].astype(jnp.float32)
    if act:
        y = jnp.where(y >= 0.0, y, NEG_SLOPE * y)
    o_ref[...] = y.astype(o_ref.dtype)


def _pool_mm_bn_kernel(a0_ref, a1_ref, a2_ref, a3_ref, b_ref, s_ref, c_ref, o_ref):
    """Shortcut: o = BN(conv1x1(AvgPool2d(2)(x))). The four refs are the 2x2 spatial
    taps; the average is fused right in front of the MXU matmul."""
    a = (a0_ref[...].astype(jnp.float32) + a1_ref[...].astype(jnp.float32)
         + a2_ref[...].astype(jnp.float32) + a3_ref[...].astype(jnp.float32)) * 0.25
    acc = jnp.dot(a.astype(jnp.bfloat16), b_ref[...],
                  preferred_element_type=jnp.float32)
    o_ref[...] = (acc * s_ref[...] + c_ref[...]).astype(o_ref.dtype)


def _head_kernel(x_ref, w_ref, b_ref, o_ref, *, inv_hw, inv_temp):
    """Fused global average pool + fc + bias + /temp (f32 math; tiny shapes)."""
    feat = jnp.sum(x_ref[...].astype(jnp.float32), axis=1) * inv_hw
    logits = jnp.dot(feat, w_ref[...], preferred_element_type=jnp.float32)
    o_ref[...] = (logits + b_ref[...]) * inv_temp


# ---------------------------------------------------------------------------
# Kernel wrappers
# ---------------------------------------------------------------------------

def _pick_tm(m):
    return 512 if m >= 512 else _round_up(m, 8)


def fused_matmul_bn_act(a, prep, *, act, res=None, out_dtype=jnp.bfloat16):
    """a [M, Kp] @ prep['wmat'] [Kp, OCp] (bf16, resident across the M grid) with the
    folded-BN epilogue, optional residual add and optional LeakyReLU."""
    wmat, scale, bias = prep["wmat"], prep["scale"], prep["bias"]
    M, K = a.shape
    Kw, OCp = wmat.shape
    assert K == Kw, (K, Kw)
    tm = _pick_tm(M)
    Mp = _round_up(M, tm)
    a = a.astype(jnp.bfloat16)
    if Mp != M:
        a = jnp.pad(a, ((0, Mp - M), (0, 0)))

    in_specs = [
        pl.BlockSpec((tm, K), lambda i: (i, 0)),      # A: streamed over M tiles
        pl.BlockSpec((K, OCp), lambda i: (0, 0)),     # B: resident weight
        pl.BlockSpec((1, OCp), lambda i: (0, 0)),     # BN scale (f32)
        pl.BlockSpec((1, OCp), lambda i: (0, 0)),     # BN bias  (f32)
    ]
    args = [a, wmat, scale, bias]
    if res is not None:
        r = res.astype(jnp.bfloat16)
        rm, rc = r.shape
        if rm != Mp or rc != OCp:
            r = jnp.pad(r, ((0, Mp - rm), (0, OCp - rc)))
        in_specs.append(pl.BlockSpec((tm, OCp), lambda i: (i, 0)))
        args.append(r)
        kern = functools.partial(_mm_bn_res_kernel, act=act)
    else:
        kern = functools.partial(_mm_bn_kernel, act=act)

    out = pl.pallas_call(
        kern,
        out_shape=jax.ShapeDtypeStruct((Mp, OCp), out_dtype),
        grid=(Mp // tm,),
        in_specs=in_specs,
        out_specs=pl.BlockSpec((tm, OCp), lambda i: (i, 0)),
        compiler_params=pltpu.CompilerParams(dimension_semantics=("parallel",)),
    )(*args)
    return out[:M]


def conv_bn_act(x, prep, *, stride, padding, act, res=None):
    """x NHWC (any float dtype) -> NHWC bf16. im2col (XLA glue, bf16 patches) feeding
    the fused Pallas matmul + BN / LeakyReLU / residual epilogue."""
    N, H, W, C = x.shape
    KH, KW, OC = prep["kh"], prep["kw"], prep["oc"]
    Kp = prep["wmat"].shape[0]
    K = KH * KW * C
    xb = x.astype(jnp.bfloat16)
    if padding:
        xb = jnp.pad(xb, ((0, 0), (padding, padding), (padding, padding), (0, 0)))
    OH = (H + 2 * padding - KH) // stride + 1
    OW = (W + 2 * padding - KW) // stride + 1
    taps = []
    for i in range(KH):
        for j in range(KW):
            taps.append(xb[:, i:i + stride * OH:stride, j:j + stride * OW:stride, :])
    if Kp > K:                       # lane-pad K once, inside the single concat
        taps.append(jnp.zeros((N, OH, OW, Kp - K), jnp.bfloat16))
    patches = taps[0] if len(taps) == 1 else jnp.concatenate(taps, axis=-1)
    a = patches.reshape(N * OH * OW, Kp)
    out2d = fused_matmul_bn_act(a, prep, act=act, res=res)
    return out2d[:, :OC].reshape(N, OH, OW, OC)


def shortcut_pool_conv_bn(x, prep):
    """Fused AvgPool2d(2) + SN 1x1 conv + BN -> residual [M, OCp] bf16."""
    # TODO(synk): assumes stride==2 and even H, W (true for this ResNet-18 config).
    N, H, W, C = x.shape
    OH, OW = H // 2, W // 2
    M = N * OH * OW
    K, OCp = prep["wmat"].shape
    assert K == C
    xb = x.astype(jnp.bfloat16)
    taps = [xb[:, di::2, dj::2, :].reshape(M, C) for di in (0, 1) for dj in (0, 1)]
    tm = _pick_tm(M)
    Mp = _round_up(M, tm)
    if Mp != M:
        taps = [jnp.pad(t, ((0, Mp - M), (0, 0))) for t in taps]
    in_specs = ([pl.BlockSpec((tm, C), lambda i: (i, 0))] * 4 +
                [pl.BlockSpec((C, OCp), lambda i: (0, 0)),
                 pl.BlockSpec((1, OCp), lambda i: (0, 0)),
                 pl.BlockSpec((1, OCp), lambda i: (0, 0))])
    out = pl.pallas_call(
        _pool_mm_bn_kernel,
        out_shape=jax.ShapeDtypeStruct((Mp, OCp), jnp.bfloat16),
        grid=(Mp // tm,),
        in_specs=in_specs,
        out_specs=pl.BlockSpec((tm, OCp), lambda i: (i, 0)),
        compiler_params=pltpu.CompilerParams(dimension_semantics=("parallel",)),
    )(*taps, prep["wmat"], prep["scale"], prep["bias"])
    return out[:M]


def head_forward(x, fc_wT, fc_b):
    """Fused F.avg_pool2d(x, H) + fc + bias, divided by temperature."""
    N, H, W, C = x.shape
    HW = H * W
    Nr = _round_up(N, 8)
    OCp = fc_wT.shape[1]
    xr = x.astype(jnp.bfloat16).reshape(N, HW, C)
    if Nr != N:
        xr = jnp.pad(xr, ((0, Nr - N), (0, 0), (0, 0)))
    out = pl.pallas_call(
        functools.partial(_head_kernel, inv_hw=1.0 / HW, inv_temp=1.0 / TEMP),
        out_shape=jax.ShapeDtypeStruct((Nr, OCp), jnp.float32),
        grid=(1,),
        in_specs=[pl.BlockSpec((Nr, HW, C), lambda i: (0, 0, 0)),
                  pl.BlockSpec((C, OCp), lambda i: (0, 0)),
                  pl.BlockSpec((1, OCp), lambda i: (0, 0))],
        out_specs=pl.BlockSpec((Nr, OCp), lambda i: (0, 0)),
    )(xr, fc_wT, fc_b)
    return out[:N, :NUM_CLASSES]


# ---------------------------------------------------------------------------
# Parameter construction (deterministic synthetic init, eval-mode SN scaling,
# weights pre-transformed/pre-padded/pre-cast once here — not per forward)
# ---------------------------------------------------------------------------

def _prep_conv(w_oihw, bn_scale, bn_bias, *, pad_k=True):
    """OIHW conv weight + folded BN -> (Kp, OCp) bf16 matmul operand whose rows match
    the im2col tap-major layout, plus padded (1, OCp) f32 scale/bias."""
    OC, IC, KH, KW = w_oihw.shape
    K = KH * KW * IC
    Kp = _round_up(K, 128) if pad_k else K
    OCp = _round_up(OC, 128)
    wmat = jnp.transpose(w_oihw, (2, 3, 1, 0)).reshape(K, OC)
    wmat = jnp.pad(wmat, ((0, Kp - K), (0, OCp - OC))).astype(jnp.bfloat16)
    scale = jnp.pad(bn_scale, (0, OCp - OC)).reshape(1, OCp).astype(jnp.float32)
    bias = jnp.pad(bn_bias, (0, OCp - OC)).reshape(1, OCp).astype(jnp.float32)
    return {"wmat": wmat, "scale": scale, "bias": bias,
            "kh": KH, "kw": KW, "oc": OC}


def _conv_plain(x, w_oihw, stride, padding):
    """Conv with identity epilogue (used for the eval-path SN sigma estimate)."""
    OC = w_oihw.shape[0]
    prep = _prep_conv(w_oihw, jnp.ones((OC,), jnp.float32),
                      jnp.zeros((OC,), jnp.float32), pad_k=(w_oihw.shape[2] > 1))
    return conv_bn_act(x, prep, stride=stride, padding=padding, act=False)


def _make_bn(key, c):
    k1, k2, k3, k4 = jax.random.split(key, 4)
    gamma = 1.0 + 0.1 * jax.random.normal(k1, (c,), jnp.float32)
    beta = 0.1 * jax.random.normal(k2, (c,), jnp.float32)
    running_mean = 0.1 * jax.random.normal(k3, (c,), jnp.float32)
    running_var = 1.0 + 0.1 * jnp.abs(jax.random.normal(k4, (c,), jnp.float32))
    scale = gamma / jnp.sqrt(running_var + BN_EPS)
    bias = beta - running_mean * scale
    return scale, bias


def _make_sn_conv(key, in_c, out_c, k, stride, input_size, coeff):
    """Conv weight with spectral normalization applied (eval path, no power iter)."""
    kw, ku, kv = jax.random.split(key, 3)
    fan_in = in_c * k * k
    w = jax.random.normal(kw, (out_c, in_c, k, k), jnp.float32) * math.sqrt(2.0 / fan_in)
    if k == 1:
        # spectral_norm_fc: sigma = u^T W_mat v, W /= max(1, sigma/coeff)
        u = _l2n(jax.random.normal(ku, (out_c,), jnp.float32))
        v = _l2n(jax.random.normal(kv, (in_c,), jnp.float32))
        wm = w.reshape(out_c, -1)
        sigma = jnp.dot(u, wm @ v)
        factor = jnp.maximum(1.0, sigma / coeff)
        return w / factor
    # spectral_norm_conv: sigma = u . vec(conv(v_img, W)), W /= (max(1, sigma/coeff)+1e-5)
    padding = 1
    oh = (input_size + 2 * padding - k) // stride + 1
    v = _l2n(jax.random.normal(kv, (in_c * input_size * input_size,), jnp.float32))
    u = _l2n(jax.random.normal(ku, (out_c * oh * oh,), jnp.float32))
    v_img = jnp.transpose(v.reshape(1, in_c, input_size, input_size), (0, 2, 3, 1))
    wv = _conv_plain(v_img, w, stride=stride, padding=padding)   # reuse Pallas conv path
    sigma = jnp.dot(u, wv.reshape(-1).astype(jnp.float32))
    factor = jnp.maximum(1.0, sigma / coeff)
    return w / (factor + 1e-5)


def init_params(key):
    keys = iter(jax.random.split(key, 256))
    nk = lambda: next(keys)
    P = {}
    # stem: conv1 (SN conv, 3->64, k=3, s=1, input_size=32), bn1 folded in
    w = _make_sn_conv(nk(), 3, 64, 3, 1, 32, COEFF)
    s, b = _make_bn(nk(), 64)
    P["stem"] = _prep_conv(w, s, b)

    def make_block(in_c, out_c, stride, input_size):
        blk = {"stride": stride, "has_shortcut": (stride != 1 or in_c != out_c)}
        w1 = _make_sn_conv(nk(), in_c, out_c, 3, stride, input_size, COEFF)
        s1, b1 = _make_bn(nk(), out_c)
        blk["c1"] = _prep_conv(w1, s1, b1)
        out_size = math.ceil(input_size / stride)
        w2 = _make_sn_conv(nk(), out_c, out_c, 3, 1, out_size, COEFF)
        s2, b2 = _make_bn(nk(), out_c)
        blk["c2"] = _prep_conv(w2, s2, b2)
        if blk["has_shortcut"]:
            # mod=True shortcut: AvgPool2d(stride) -> SN 1x1 conv (fc-style SN) -> BN
            wsc = _make_sn_conv(nk(), in_c, out_c, 1, 1, out_size, COEFF)
            ssc, bsc = _make_bn(nk(), out_c)
            blk["sc"] = _prep_conv(wsc, ssc, bsc, pad_k=False)
        return blk

    num_blocks = [2, 2, 2, 2]                       # ResNet-18
    layer_cfg = [(32, 64, 1), (32, 128, 2), (16, 256, 2), (8, 512, 2)]
    in_planes = 64
    for li, (isize, planes, stride) in enumerate(layer_cfg, start=1):
        blocks = []
        strides = [stride] + [1] * (num_blocks[li - 1] - 1)
        cur = isize
        for st in strides:
            blocks.append(make_block(in_planes, planes, st, cur))
            in_planes = planes
            cur = math.ceil(cur / st)
        P[f"layer{li}"] = blocks

    kfw, kfb = jax.random.split(nk())
    bound = 1.0 / math.sqrt(512)
    fc_w = jax.random.uniform(kfw, (NUM_CLASSES, 512), jnp.float32, -bound, bound)
    fc_b = jax.random.uniform(kfb, (NUM_CLASSES,), jnp.float32, -bound, bound)
    ocp = _round_up(NUM_CLASSES, 128)
    P["fc_wT"] = jnp.pad(fc_w.T, ((0, 0), (0, ocp - NUM_CLASSES)))          # (512, 128) f32
    P["fc_b"] = jnp.pad(fc_b, (0, ocp - NUM_CLASSES)).reshape(1, ocp)       # (1, 128)  f32
    return P


# ---------------------------------------------------------------------------
# Forward pass
# ---------------------------------------------------------------------------

def basic_block_forward(x, p):
    stride = p["stride"]
    # out = act(bn1(conv1(x)))   (fused)
    out = conv_bn_act(x, p["c1"], stride=stride, padding=1, act=True)
    # residual path
    if p["has_shortcut"]:
        if stride != 1:
            res = shortcut_pool_conv_bn(x, p["sc"])            # fused pool+1x1conv+BN
        else:
            sx = conv_bn_act(x, p["sc"], stride=1, padding=0, act=False)
            res = sx.reshape(-1, sx.shape[-1])
    else:
        res = x.reshape(-1, x.shape[-1])
    # out = act(bn2(conv2(out)) + residual)   (fused)
    return conv_bn_act(out, p["c2"], stride=1, padding=1, act=True, res=res)


def resnet_forward(x_nchw, params):
    x = jnp.transpose(x_nchw, (0, 2, 3, 1)).astype(jnp.float32)   # NCHW -> NHWC
    out = conv_bn_act(x, params["stem"], stride=1, padding=1, act=True)
    for lname in ("layer1", "layer2", "layer3", "layer4"):
        for blk in params[lname]:
            out = basic_block_forward(out, blk)
    # F.avg_pool2d(out, 4) + fc + /temp, fused in one kernel
    return head_forward(out, params["fc_wT"], params["fc_b"])


# ---------------------------------------------------------------------------

if __name__ == "__main__":
    root = jax.random.PRNGKey(0)
    pkey, xkey = jax.random.split(root)
    params = init_params(pkey)

    # Input implied by the module: CIFAR-style NCHW [B, 3, 32, 32] (conv1 SN asserts 3x32x32).
    x = jax.random.normal(xkey, (2, 3, 32, 32), jnp.float32)

    fwd = jax.jit(lambda inp: resnet_forward(inp, params))
    logits = jax.block_until_ready(fwd(x))

    assert logits.shape == (2, NUM_CLASSES), logits.shape
    assert bool(jnp.all(jnp.isfinite(logits)))
    print("KERNEL_OK")
</pallas_src>

<mosaic_0001>
module attributes {stable_mosaic.version = 11 : i64} {
  func.func @_mm_bn_kernel(%arg0: i32, %arg1: memref<512x128xbf16, #tpu.memory_space<vmem>>, %arg2: memref<128x128xbf16, #tpu.memory_space<vmem>>, %arg3: memref<1x128xf32, #tpu.memory_space<vmem>>, %arg4: memref<1x128xf32, #tpu.memory_space<vmem>>, %arg5: memref<512x128xbf16, #tpu.memory_space<vmem>>) attributes {dimension_semantics = [#tpu.dimension_semantics<parallel>], iteration_bounds = array<i64: 2>, scalar_prefetch = 0 : i64, scratch_operands = 0 : i64, tpu.core_type = #tpu.core_type<tc>, window_params = [{transform_indices = @transform_0, window_bounds = array<i64: 512, 128>}, {pipeline_mode = #tpu.pipeline_mode<synchronous>, transform_indices = @transform_1, window_bounds = array<i64: 128, 128>}, {pipeline_mode = #tpu.pipeline_mode<synchronous>, transform_indices = @transform_2, window_bounds = array<i64: 1, 128>}, {pipeline_mode = #tpu.pipeline_mode<synchronous>, transform_indices = @transform_3, window_bounds = array<i64: 1, 128>}, {transform_indices = @transform_4, window_bounds = array<i64: 512, 128>}]} {
    %c0 = arith.constant 0 : index
    %c0_0 = arith.constant 0 : index
    %0 = vector.load %arg1[%c0, %c0_0] : memref<512x128xbf16, #tpu.memory_space<vmem>>, vector<512x128xbf16>
    %c0_1 = arith.constant 0 : index
    %c0_2 = arith.constant 0 : index
    %1 = vector.load %arg2[%c0_1, %c0_2] : memref<128x128xbf16, #tpu.memory_space<vmem>>, vector<128x128xbf16>
    %cst = arith.constant dense<0.000000e+00> : vector<512x128xf32>
    %2 = tpu.matmul %0, %1, %cst {dimension_numbers = #tpu.dot_dimension_numbers<[1], [0], [0], [1], [0, 0, 1, 1], [], []>} : vector<512x128xbf16>, vector<128x128xbf16>, vector<512x128xf32> -> vector<512x128xf32>
    %c0_3 = arith.constant 0 : index
    %c0_4 = arith.constant 0 : index
    %3 = vector.load %arg3[%c0_3, %c0_4] : memref<1x128xf32, #tpu.memory_space<vmem>>, vector<1x128xf32>
    %4 = vector.broadcast %3 : vector<1x128xf32> to vector<512x128xf32>
    %5 = arith.mulf %2, %4 : vector<512x128xf32>
    %c0_5 = arith.constant 0 : index
    %c0_6 = arith.constant 0 : index
    %6 = vector.load %arg4[%c0_5, %c0_6] : memref<1x128xf32, #tpu.memory_space<vmem>>, vector<1x128xf32>
    %7 = vector.broadcast %6 : vector<1x128xf32> to vector<512x128xf32>
    %8 = arith.addf %5, %7 : vector<512x128xf32>
    %9 = arith.truncf %8 : vector<512x128xf32> to vector<512x128xbf16>
    %c0_7 = arith.constant 0 : index
    %c0_8 = arith.constant 0 : index
    %10 = vector.load %arg5[%c0_7, %c0_8] : memref<512x128xbf16, #tpu.memory_space<vmem>>, vector<512x128xbf16>
    tpu.vector_store %arg5[%c0_7, %c0_8], %9 {strides = array<i32>} : memref<512x128xbf16, #tpu.memory_space<vmem>>, vector<512x128xbf16>,
    return
  }
  func.func @transform_0(%arg0: i32) -> (i32, i32) {
    %c0_i32 = arith.constant 0 : i32
    %c0_i32_0 = arith.constant 0 : i32
    return %arg0, %c0_i32 : i32, i32
  }
  func.func @transform_1(%arg0: i32) -> (i32, i32) {
    %c0_i32 = arith.constant 0 : i32
    %c0_i32_0 = arith.constant 0 : i32
    %c0_i32_1 = arith.constant 0 : i32
    return %c0_i32, %c0_i32_0 : i32, i32
  }
  func.func @transform_2(%arg0: i32) -> (i32, i32) {
    %c0_i32 = arith.constant 0 : i32
    %c0_i32_0 = arith.constant 0 : i32
    %c0_i32_1 = arith.constant 0 : i32
    return %c0_i32, %c0_i32_0 : i32, i32
  }
  func.func @transform_3(%arg0: i32) -> (i32, i32) {
    %c0_i32 = arith.constant 0 : i32
    %c0_i32_0 = arith.constant 0 : i32
    %c0_i32_1 = arith.constant 0 : i32
    return %c0_i32, %c0_i32_0 : i32, i32
  }
  func.func @transform_4(%arg0: i32) -> (i32, i32) {
    %c0_i32 = arith.constant 0 : i32
    %c0_i32_0 = arith.constant 0 : i32
    return %arg0, %c0_i32 : i32, i32
  }
}

</mosaic_0001>

<llo_original>
// kernel: tpu_custom_call.1
$region0: #{tpu_custom_call.1}
  #allocation0 [shape = 'u32[]', space=smem, size = 0x4, offset = 0x4, fixed_abs, tag = 'smem constant byte address 0x4 - core index']
  #allocation1 [shape = 'u32[72,128]{1,0:T(1,128)}', space=vmem, size = 0x9000, scoped, tag = 'internal scratch']
  %s0 = inlined_call_operand.hbm [shape: bf16[1024,128], index: 0, kind: input, shape index: {}]
  %s1 = inlined_call_operand.hbm [shape: bf16[128,128], index: 1, kind: input, shape index: {}]
  %s2 = inlined_call_operand.vmem [shape: f32[1,128], index: 2, kind: input, shape index: {}]
  %s3 = inlined_call_operand.vmem [shape: f32[1,128], index: 3, kind: input, shape index: {}]
  %s4 = inlined_call_operand.hbm [shape: bf16[1024,128], index: 4, kind: output, shape index: {}]
  %s5 = sld [smem:[#allocation0]]
  $region57: #{tpu_custom_call.1} parent=0
    _
  %s7 = ssub.s32 1, %s5
  %s8 = scalar_select 0, %s7, %s5
  $region1: #{tpu_custom_call.1} parent=0
    #allocation2 [shape = 'u8[262144]{0}', space=vmem, size = 0x40000, scoped, tag = 'input window, operand 0']
    #allocation3 [shape = 's32[2]{0}', space=sflag, size = 0x8, scoped, tag = 'scoped memory for tpu_custom_call.1']
    #allocation4 [shape = 's32[2]{0}', space=sflag, size = 0x8, scoped, tag = 'scoped memory for tpu_custom_call.1']
    #allocation5 [shape = 'u8[32768]{0}', space=vmem, size = 0x8000, scoped, tag = 'input window, operand 1, single buffered']
    #allocation6 [shape = 's32[1]{0}', space=sflag, size = 0x4, scoped, tag = 'scoped memory for tpu_custom_call.1']
    #allocation7 [shape = 'u8[262144]{0}', space=vmem, size = 0x40000, scoped, tag = 'output window, operand 0']
    %9 = vsyncpa [#allocation3], 0
    %s10 = scalar_lea.sflag [#allocation3], 1
    %11 = vsyncpa %s10, 0
    %12 = vsyncpa [#allocation6], 0
    %13 = vsyncpa [#allocation4], 0
    %s14 = scalar_lea.sflag [#allocation4], 1
    %15 = vsyncpa %s14, 0
    loop: start=0, step=1, limit=4
    $region2: #{tpu_custom_call.1} parent=1 // loop_pre_header
      _
    $region3: #{tpu_custom_call.1} parent=1 // loop_header
      %s17 = sphi 0, %s21
      %p18 = scmp.ge.s32.totalorder %s17, 4
      %s27 = sphi 0, %s29
      %s30 = sphi 0, %s27
      %s31 = sphi 0, %s30
      %s47 = sphi 0, %s31
      %s51 = sphi 0, %s51
      %s53 = sphi 0, %s51
      %s54 = sphi 0, %s53
      %s68 = sphi 0, %s54
      %s72 = sphi 0, %s72
      %s74 = sphi 0, %s72
      %s75 = sphi 0, %s74
      %s89 = sphi 0, %s75
      %s93 = sphi 0, %s93
      %s95 = sphi 0, %s93
      %s96 = sphi 0, %s95
      %s110 = sphi 0, %s96
      %s116 = sphi 0, %s118
      %s119 = sphi 0, %s116
      %s120 = sphi 0, %s119
      %s136 = sphi 0, %s120
    $region4: #{tpu_custom_call.1} parent=1 // loop_header_branch
      %20 = sbr.rel (%p18) target = $region8
    $region5: #{tpu_custom_call.1} parent=1 // loop_body
      %s22 = ssub.s32 %s17, 1
      %s23 = ssub.s32 %s17, 2
      %s24 = sadd.s32 %s17, 1
      %s25 = ssub.s32 %s17, %s24
      %p26 = scmp.eq.s32.totalorder %s25, 0
      %s28 = sadd.s32 %s27, 1
      %s29 = scalar_select %p26, %s27, %s28
      %p32 = pneg %p26
      %p33 = scmp.eq.s32.totalorder %s17, 1
      %p34 = por %p32, %p33
      %p35 = scmp.ne.s32.totalorder %s27, %s30
      %p36 = scmp.eq.s32.totalorder %s17, 0
      %p37 = por %p35, %p36
      %p38 = scmp.ne.s32.totalorder %s27, %s30
      %p39 = scmp.eq.s32.totalorder %s22, 1
      %p40 = por %p38, %p39
      %p41 = scmp.ne.s32.totalorder %s30, %s31
      %p42 = scmp.eq.s32.totalorder %s22, 0
      %p43 = por %p41, %p42
      %p44 = scmp.ne.s32.totalorder %s30, %s31
      %p45 = scmp.eq.s32.totalorder %s23, 1
      %p46 = por %p44, %p45
      %p48 = scmp.ne.s32.totalorder %s31, %s47
      %p49 = scmp.eq.s32.totalorder %s23, 0
      %p50 = por %p48, %p49
      %s52 = sadd.s32 %s51, 1
      %p55 = scmp.eq.s32.totalorder %s17, 1
      %p56 = scmp.ne.s32.totalorder %s51, %s53
      %p57 = scmp.eq.s32.totalorder %s17, 0
      %p58 = por %p56, %p57
      %p59 = scmp.ne.s32.totalorder %s51, %s53
      %p60 = scmp.eq.s32.totalorder %s22, 1
      %p61 = por %p59, %p60
      %p62 = scmp.ne.s32.totalorder %s53, %s54
      %p63 = scmp.eq.s32.totalorder %s22, 0
      %p64 = por %p62, %p63
      %p65 = scmp.ne.s32.totalorder %s53, %s54
      %p66 = scmp.eq.s32.totalorder %s23, 1
      %p67 = por %p65, %p66
      %p69 = scmp.ne.s32.totalorder %s54, %s68
      %p70 = scmp.eq.s32.totalorder %s23, 0
      %p71 = por %p69, %p70
      %s73 = sadd.s32 %s72, 1
      %p76 = scmp.eq.s32.totalorder %s17, 1
      %p77 = scmp.ne.s32.totalorder %s72, %s74
      %p78 = scmp.eq.s32.totalorder %s17, 0
      %p79 = por %p77, %p78
      %p80 = scmp.ne.s32.totalorder %s72, %s74
      %p81 = scmp.eq.s32.totalorder %s22, 1
      %p82 = por %p80, %p81
      %p83 = scmp.ne.s32.totalorder %s74, %s75
      %p84 = scmp.eq.s32.totalorder %s22, 0
      %p85 = por %p83, %p84
      %p86 = scmp.ne.s32.totalorder %s74, %s75
      %p87 = scmp.eq.s32.totalorder %s23, 1
      %p88 = por %p86, %p87
      %p90 = scmp.ne.s32.totalorder %s75, %s89
      %p91 = scmp.eq.s32.totalorder %s23, 0
      %p92 = por %p90, %p91
      %s94 = sadd.s32 %s93, 1
      %p97 = scmp.eq.s32.totalorder %s17, 1
      %p98 = scmp.ne.s32.totalorder %s93, %s95
      %p99 = scmp.eq.s32.totalorder %s17, 0
      %p100 = por %p98, %p99
      %p101 = scmp.ne.s32.totalorder %s93, %s95
      %p102 = scmp.eq.s32.totalorder %s22, 1
      %p103 = por %p101, %p102
      %p104 = scmp.ne.s32.totalorder %s95, %s96
      %p105 = scmp.eq.s32.totalorder %s22, 0
      %p106 = por %p104, %p105
      %p107 = scmp.ne.s32.totalorder %s95, %s96
      %p108 = scmp.eq.s32.totalorder %s23, 1
      %p109 = por %p107, %p108
      %p111 = scmp.ne.s32.totalorder %s96, %s110
      %p112 = scmp.eq.s32.totalorder %s23, 0
      %p113 = por %p111, %p112
      %s114 = ssub.s32 %s17, %s24
      %p115 = scmp.eq.s32.totalorder %s114, 0
      %s117 = sadd.s32 %s116, 1
      %s118 = scalar_select %p115, %s116, %s117
      %p121 = pneg %p115
      %p122 = scmp.eq.s32.totalorder %s17, 1
      %p123 = por %p121, %p122
      %p124 = scmp.ne.s32.totalorder %s116, %s119
      %p125 = scmp.eq.s32.totalorder %s17, 0
      %p126 = por %p124, %p125
      %p127 = scmp.ne.s32.totalorder %s116, %s119
      %p128 = scmp.eq.s32.totalorder %s22, 1
      %p129 = por %p127, %p128
      %p130 = scmp.ne.s32.totalorder %s119, %s120
      %p131 = scmp.eq.s32.totalorder %s22, 0
      %p132 = por %p130, %p131
      %p133 = scmp.ne.s32.totalorder %s119, %s120
      %p134 = scmp.eq.s32.totalorder %s23, 1
      %p135 = por %p133, %p134
      %p137 = scmp.ne.s32.totalorder %s120, %s136
      %p138 = scmp.eq.s32.totalorder %s23, 0
      %p139 = por %p137, %p138
      %p140 = scmp.le.s32.totalorder 1, %s17
      %p141 = scmp.lt.s32.totalorder %s17, 3
      %p142 = pnand %p140, %p141
      %p143 = pneg %p142
      // Predicated region
      $region9: #{tpu_custom_call.1} parent=5 // pred_check
        _
      $region10: #{tpu_custom_call.1} parent=5 // pred_check_branch
        %145 = sbr.rel (%p142) target = $region12
      $region11: #{tpu_custom_call.1} parent=5 // pred_region
        %s146 = ssub.s32 %s17, 1
        // Predicated region
        $region13: #{tpu_custom_call.1} parent=11 // pred_check
          %p147 = pneg %p64
        $region14: #{tpu_custom_call.1} parent=11 // pred_check_branch
          %149 = sbr.rel (%p147) target = $region16
        $region15: #{tpu_custom_call.1} parent=11 // pred_region
          %151 = vsyncadd [#allocation6], 0
          %s152 = sshll.u32 %s1, 4
          %s153 = int_to_ptr.hbm [resolvable:$true] %s152
          %s154 = sshll.u32 [#allocation5], 4
          %s155 = int_to_ptr.vmem [resolvable:$true] %s154
          %160 = dma.hbm_to_vmem [thread:$0]  %s153, 1024, %s155, [#allocation6], 64, 64, 4
        $region16: #{tpu_custom_call.1} parent=11 // pred_fallthru
          _
        // Predicated region
        $region17: #{tpu_custom_call.1} parent=11 // pred_check
          %p161 = pneg %p85
        $region18: #{tpu_custom_call.1} parent=11 // pred_check_branch
          %163 = sbr.rel (%p161) target = $region20
        $region19: #{tpu_custom_call.1} parent=11 // pred_region
          _
        $region20: #{tpu_custom_call.1} parent=11 // pred_fallthru
          _
        // Predicated region
        $region21: #{tpu_custom_call.1} parent=11 // pred_check
          %p164 = pneg %p106
        $region22: #{tpu_custom_call.1} parent=11 // pred_check_branch
          %166 = sbr.rel (%p164) target = $region24
        $region23: #{tpu_custom_call.1} parent=11 // pred_region
          _
        $region24: #{tpu_custom_call.1} parent=11 // pred_fallthru
          _
      $region12: #{tpu_custom_call.1} parent=5 // pred_fallthru
        _
      %p167 = scmp.lt.s32.totalorder %s17, 2
      // Predicated region
      $region25: #{tpu_custom_call.1} parent=5 // pred_check
        %p168 = pneg %p167
      $region26: #{tpu_custom_call.1} parent=5 // pred_check_branch
        %170 = sbr.rel (%p168) target = $region28
      $region27: #{tpu_custom_call.1} parent=5 // pred_region
        // Predicated region
        $region29: #{tpu_custom_call.1} parent=27 // pred_check
          %p171 = pneg %p37
        $region30: #{tpu_custom_call.1} parent=27 // pred_check_branch
          %173 = sbr.rel (%p171) target = $region32
        $region31: #{tpu_custom_call.1} parent=27 // pred_region
          %s174 = sand.u32 %s27, 1
          %s175 = scalar_lea.sflag [#allocation3], %s174
          %s176 = sand.u32 %s27, 1
          %s177 = smul.addr %s176, 256
          %s178 = scalar_lea.vmem [#allocation2], %s177
          %s179 = smul.u32 64, %s17
          %181 = vsyncadd %s175, 0
          %s182 = smul.addr %s179, 4
          %s183 = scalar_lea.hbm %s0, %s182
          %s184 = sshll.u32 %s183, 4
          %s185 = int_to_ptr.hbm [resolvable:$true] %s184
          %s186 = sshll.u32 %s178, 4
          %s187 = int_to_ptr.vmem [resolvable:$true] %s186
          %192 = dma.hbm_to_vmem [thread:$0]  %s185, 4096, %s187, %s175, 64, 64, 4
        $region32: #{tpu_custom_call.1} parent=27 // pred_fallthru
          _
      $region28: #{tpu_custom_call.1} parent=5 // pred_fallthru
        _
      %p193 = scmp.le.s32.totalorder 1, %s17
      %p194 = scmp.lt.s32.totalorder %s17, 3
      %p195 = pnand %p193, %p194
      %p196 = pneg %p195
      // Predicated region
      $region33: #{tpu_custom_call.1} parent=5 // pred_check
        _
      $region34: #{tpu_custom_call.1} parent=5 // pred_check_branch
        %198 = sbr.rel (%p195) target = $region36
      $region35: #{tpu_custom_call.1} parent=5 // pred_region
        %s199 = ssub.s32 %s17, 1
        %s200 = sand.u32 %s30, 1
        %s201 = scalar_lea.sflag [#allocation3], %s200
        %s202 = sand.u32 %s30, 1
        %s203 = smul.addr %s202, 256
        %s204 = scalar_lea.vmem [#allocation2], %s203
        // Predicated region
        $region37: #{tpu_custom_call.1} parent=35 // pred_check
          %p205 = pneg %p43
        $region38: #{tpu_custom_call.1} parent=35 // pred_check_branch
          %207 = sbr.rel (%p205) target = $region40
        $region39: #{tpu_custom_call.1} parent=35 // pred_region
          %209 = dma.done %s201, 4096
        $region40: #{tpu_custom_call.1} parent=35 // pred_fallthru
          _
        // Predicated region
        $region41: #{tpu_custom_call.1} parent=35 // pred_check
          %p210 = pneg %p64
        $region42: #{tpu_custom_call.1} parent=35 // pred_check_branch
          %212 = sbr.rel (%p210) target = $region44
        $region43: #{tpu_custom_call.1} parent=35 // pred_region
          %214 = dma.done [#allocation6], 1024
        $region44: #{tpu_custom_call.1} parent=35 // pred_fallthru
          _
        %s215 = sand.u32 %s30, 1
        %s216 = scalar_lea.sflag [#allocation3], %s215
        %s217 = sand.u32 %s30, 1
        %s218 = smul.addr %s217, 256
        %s219 = scalar_lea.vmem [#allocation2], %s218
        %p220 = pneg %p43
        %p221 = pneg %p40
        %p222 = pneg %p64
        %p223 = pneg %p61
        %p224 = pneg %p85
        %p225 = pneg %p82
        %p226 = pneg %p106
        %p227 = pneg %p103
        %p228 = pneg %p132
        %p229 = pneg %p129
        %s230 = sand.u32 %s119, 1
        %s231 = scalar_lea.sflag [#allocation4], %s230
        %s232 = sand.u32 %s119, 1
        %s233 = smul.addr %s232, 256
        %s234 = scalar_lea.vmem [#allocation7], %s233
        %s235 = smul.u32 64, %s22
        %s236 = smul.u32 64, %s22
        %v237 = vld [vmem:[%s204] sm:$0xf]
        %v238 = vld [vmem:[%s204 + $0x4] sm:$0xf]
        %v239 = vld [vmem:[%s204 + $0x8] sm:$0xf]
        %v240 = vld [vmem:[%s204 + $0xc] sm:$0xf]
        %v241 = vld [vmem:[%s204 + $0x10] sm:$0xf]
        %v242 = vld [vmem:[%s204 + $0x14] sm:$0xf]
        %v243 = vld [vmem:[%s204 + $0x18] sm:$0xf]
        %v244 = vld [vmem:[%s204 + $0x1c] sm:$0xf]
        %v245 = vld [vmem:[%s204 + $0x20] sm:$0xf]
        %v246 = vld [vmem:[%s204 + $0x24] sm:$0xf]
        %v247 = vld [vmem:[%s204 + $0x28] sm:$0xf]
        %v248 = vld [vmem:[%s204 + $0x2c] sm:$0xf]
        %v249 = vld [vmem:[%s204 + $0x30] sm:$0xf]
        %v250 = vld [vmem:[%s204 + $0x34] sm:$0xf]
        %v251 = vld [vmem:[%s204 + $0x38] sm:$0xf]
        %v252 = vld [vmem:[%s204 + $0x3c] sm:$0xf]
        %v253 = vld [vmem:[%s204 + $0x40] sm:$0xf]
        %v254 = vld [vmem:[%s204 + $0x44] sm:$0xf]
        %v255 = vld [vmem:[%s204 + $0x48] sm:$0xf]
        %v256 = vld [vmem:[%s204 + $0x4c] sm:$0xf]
        %v257 = vld [vmem:[%s204 + $0x50] sm:$0xf]
        %v258 = vld [vmem:[%s204 + $0x54] sm:$0xf]
        %v259 = vld [vmem:[%s204 + $0x58] sm:$0xf]
        %v260 = vld [vmem:[%s204 + $0x5c] sm:$0xf]
        %v261 = vld [vmem:[%s204 + $0x60] sm:$0xf]
        %v262 = vld [vmem:[%s204 + $0x64] sm:$0xf]
        %v263 = vld [vmem:[%s204 + $0x68] sm:$0xf]
        %v264 = vld [vmem:[%s204 + $0x6c] sm:$0xf]
        %v265 = vld [vmem:[%s204 + $0x70] sm:$0xf]
        %v266 = vld [vmem:[%s204 + $0x74] sm:$0xf]
        %v267 = vld [vmem:[%s204 + $0x78] sm:$0xf]
        %v268 = vld [vmem:[%s204 + $0x7c] sm:$0xf]
        %v269 = vld [vmem:[%s204 + $0x80] sm:$0xf]
        %v270 = vld [vmem:[%s204 + $0x84] sm:$0xf]
        %v271 = vld [vmem:[%s204 + $0x88] sm:$0xf]
        %v272 = vld [vmem:[%s204 + $0x8c] sm:$0xf]
        %v273 = vld [vmem:[%s204 + $0x90] sm:$0xf]
        %v274 = vld [vmem:[%s204 + $0x94] sm:$0xf]
        %v275 = vld [vmem:[%s204 + $0x98] sm:$0xf]
        %v276 = vld [vmem:[%s204 + $0x9c] sm:$0xf]
        %v277 = vld [vmem:[%s204 + $0xa0] sm:$0xf]
        %v278 = vld [vmem:[%s204 + $0xa4] sm:$0xf]
        %v279 = vld [vmem:[%s204 + $0xa8] sm:$0xf]
        %v280 = vld [vmem:[%s204 + $0xac] sm:$0xf]
        %v281 = vld [vmem:[%s204 + $0xb0] sm:$0xf]
        %v282 = vld [vmem:[%s204 + $0xb4] sm:$0xf]
        %v283 = vld [vmem:[%s204 + $0xb8] sm:$0xf]
        %v284 = vld [vmem:[%s204 + $0xbc] sm:$0xf]
        %v285 = vld [vmem:[%s204 + $0xc0] sm:$0xf]
        %v286 = vld [vmem:[%s204 + $0xc4] sm:$0xf]
        %v287 = vld [vmem:[%s204 + $0xc8] sm:$0xf]
        %v288 = vld [vmem:[%s204 + $0xcc] sm:$0xf]
        %v289 = vld [vmem:[%s204 + $0xd0] sm:$0xf]
        %v290 = vld [vmem:[%s204 + $0xd4] sm:$0xf]
        %v291 = vld [vmem:[%s204 + $0xd8] sm:$0xf]
        %v292 = vld [vmem:[%s204 + $0xdc] sm:$0xf]
        %v293 = vld [vmem:[%s204 + $0xe0] sm:$0xf]
        %v294 = vld [vmem:[%s204 + $0xe4] sm:$0xf]
        %v295 = vld [vmem:[%s204 + $0xe8] sm:$0xf]
        %v296 = vld [vmem:[%s204 + $0xec] sm:$0xf]
        %v297 = vld [vmem:[%s204 + $0xf0] sm:$0xf]
        %v298 = vld [vmem:[%s204 + $0xf4] sm:$0xf]
        %v299 = vld [vmem:[%s204 + $0xf8] sm:$0xf]
        %v300 = vld [vmem:[%s204 + $0xfc] sm:$0xf]
        %v301 = vld [vmem:[#allocation5] sm:$0xf]
        %v302 = vld [vmem:[#allocation5 + $0x4] sm:$0xf]
        %v303 = vld [vmem:[#allocation5 + $0x8] sm:$0xf]
        %v304 = vld [vmem:[#allocation5 + $0xc] sm:$0xf]
        %v305 = vld [vmem:[#allocation5 + $0x10] sm:$0xf]
        %v306 = vld [vmem:[#allocation5 + $0x14] sm:$0xf]
        %v307 = vld [vmem:[#allocation5 + $0x18] sm:$0xf]
        %v308 = vld [vmem:[#allocation5 + $0x1c] sm:$0xf]
        %v309 = vld [vmem:[#allocation5 + $0x20] sm:$0xf]
        %v310 = vld [vmem:[#allocation5 + $0x24] sm:$0xf]
        %v311 = vld [vmem:[#allocation5 + $0x28] sm:$0xf]
        %v312 = vld [vmem:[#allocation5 + $0x2c] sm:$0xf]
        %v313 = vld [vmem:[#allocation5 + $0x30] sm:$0xf]
        %v314 = vld [vmem:[#allocation5 + $0x34] sm:$0xf]
        %v315 = vld [vmem:[#allocation5 + $0x38] sm:$0xf]
        %v316 = vld [vmem:[#allocation5 + $0x3c] sm:$0xf]
        %v381 = vunpack.c.l.b16 %v237
        %v382 = vunpack.c.l.b16 %v238
        %v383 = vunpack.c.l.b16 %v239
        %v384 = vunpack.c.l.b16 %v240
        %v385 = vunpack.c.l.b16 %v241
        %v386 = vunpack.c.l.b16 %v242
        %v387 = vunpack.c.l.b16 %v243
        %v388 = vunpack.c.l.b16 %v244
        %v389 = vunpack.c.l.b16 %v245
        %v390 = vunpack.c.l.b16 %v246
        %v391 = vunpack.c.l.b16 %v247
        %v392 = vunpack.c.l.b16 %v248
        %v393 = vunpack.c.l.b16 %v249
        %v394 = vunpack.c.l.b16 %v250
        %v395 = vunpack.c.l.b16 %v251
        %v396 = vunpack.c.l.b16 %v252
        %v397 = vunpack.c.l.b16 %v253
        %v398 = vunpack.c.l.b16 %v254
        %v399 = vunpack.c.l.b16 %v255
        %v400 = vunpack.c.l.b16 %v256
        %v401 = vunpack.c.l.b16 %v257
        %v402 = vunpack.c.l.b16 %v258
        %v403 = vunpack.c.l.b16 %v259
        %v404 = vunpack.c.l.b16 %v260
        %v405 = vunpack.c.l.b16 %v261
        %v406 = vunpack.c.l.b16 %v262
        %v407 = vunpack.c.l.b16 %v263
        %v408 = vunpack.c.l.b16 %v264
        %v409 = vunpack.c.l.b16 %v265
        %v410 = vunpack.c.l.b16 %v266
        %v411 = vunpack.c.l.b16 %v267
        %v412 = vunpack.c.l.b16 %v268
        %v413 = vunpack.c.l.b16 %v269
        %v414 = vunpack.c.l.b16 %v270
        %v415 = vunpack.c.l.b16 %v271
        %v416 = vunpack.c.l.b16 %v272
        %v417 = vunpack.c.l.b16 %v273
        %v418 = vunpack.c.l.b16 %v274
        %v419 = vunpack.c.l.b16 %v275
        %v420 = vunpack.c.l.b16 %v276
        %v421 = vunpack.c.l.b16 %v277
        %v422 = vunpack.c.l.b16 %v278
        %v423 = vunpack.c.l.b16 %v279
        %v424 = vunpack.c.l.b16 %v280
        %v425 = vunpack.c.l.b16 %v281
        %v426 = vunpack.c.l.b16 %v282
        %v427 = vunpack.c.l.b16 %v283
        %v428 = vunpack.c.l.b16 %v284
        %v429 = vunpack.c.l.b16 %v285
        %v430 = vunpack.c.l.b16 %v286
        %v431 = vunpack.c.l.b16 %v287
        %v432 = vunpack.c.l.b16 %v288
        %v433 = vunpack.c.l.b16 %v289
        %v434 = vunpack.c.l.b16 %v290
        %v435 = vunpack.c.l.b16 %v291
        %v436 = vunpack.c.l.b16 %v292
        %v437 = vunpack.c.l.b16 %v293
        %v438 = vunpack.c.l.b16 %v294
        %v439 = vunpack.c.l.b16 %v295
        %v440 = vunpack.c.l.b16 %v296
        %v441 = vunpack.c.l.b16 %v297
        %v442 = vunpack.c.l.b16 %v298
        %v443 = vunpack.c.l.b16 %v299
        %v444 = vunpack.c.l.b16 %v300
        %v445 = vpack.c.b16 %v382, %v381
        %v446 = vpack.c.b16 %v384, %v383
        %v447 = vpack.c.b16 %v386, %v385
        %v448 = vpack.c.b16 %v388, %v387
        %v449 = vpack.c.b16 %v390, %v389
        %v450 = vpack.c.b16 %v392, %v391
        %v451 = vpack.c.b16 %v394, %v393
        %v452 = vpack.c.b16 %v396, %v395
        %v453 = vpack.c.b16 %v398, %v397
        %v454 = vpack.c.b16 %v400, %v399
        %v455 = vpack.c.b16 %v402, %v401
        %v456 = vpack.c.b16 %v404, %v403
        %v457 = vpack.c.b16 %v406, %v405
        %v458 = vpack.c.b16 %v408, %v407
        %v459 = vpack.c.b16 %v410, %v409
        %v460 = vpack.c.b16 %v412, %v411
        %v461 = vpack.c.b16 %v414, %v413
        %v462 = vpack.c.b16 %v416, %v415
        %v463 = vpack.c.b16 %v418, %v417
        %v464 = vpack.c.b16 %v420, %v419
        %v465 = vpack.c.b16 %v422, %v421
        %v466 = vpack.c.b16 %v424, %v423
        %v467 = vpack.c.b16 %v426, %v425
        %v468 = vpack.c.b16 %v428, %v427
        %v469 = vpack.c.b16 %v430, %v429
        %v470 = vpack.c.b16 %v432, %v431
        %v471 = vpack.c.b16 %v434, %v433
        %v472 = vpack.c.b16 %v436, %v435
        %v473 = vpack.c.b16 %v438, %v437
        %v474 = vpack.c.b16 %v440, %v439
        %v475 = vpack.c.b16 %v442, %v441
        %v476 = vpack.c.b16 %v444, %v443
        %v525 = vunpack.c.l.b16 %v301
        %v526 = vunpack.c.l.b16 %v302
        %v527 = vunpack.c.l.b16 %v303
        %v528 = vunpack.c.l.b16 %v304
        %v529 = vunpack.c.l.b16 %v305
        %v530 = vunpack.c.l.b16 %v306
        %v531 = vunpack.c.l.b16 %v307
        %v532 = vunpack.c.l.b16 %v308
        %v533 = vunpack.c.l.b16 %v309
        %v534 = vunpack.c.l.b16 %v310
        %v535 = vunpack.c.l.b16 %v311
        %v536 = vunpack.c.l.b16 %v312
        %v537 = vunpack.c.l.b16 %v313
        %v538 = vunpack.c.l.b16 %v314
        %v539 = vunpack.c.l.b16 %v315
        %v540 = vunpack.c.l.b16 %v316
        %v541 = vpack.c.b16 %v526, %v525
        %v542 = vpack.c.b16 %v528, %v527
        %v543 = vpack.c.b16 %v530, %v529
        %v544 = vpack.c.b16 %v532, %v531
        %v545 = vpack.c.b16 %v534, %v533
        %v546 = vpack.c.b16 %v536, %v535
        %v547 = vpack.c.b16 %v538, %v537
        %v548 = vpack.c.b16 %v540, %v539
        %557 = vmatpush.bf16.msra.mxu0 %v548
        %558 = vmatpush.bf16.msra.mxu0 %v547
        %559 = vmatpush.bf16.msra.mxu0 %v546
        %560 = vmatpush.bf16.msra.mxu0 %v545
        %561 = vmatpush.bf16.msra.mxu0 %v544
        %562 = vmatpush.bf16.msra.mxu0 %v543
        %563 = vmatpush.bf16.msra.mxu0 %v542
        %564 = vmatpush.bf16.msra.mxu0 %v541
        %565 = vmatmul.bf16.gmra.mxu0 %v445
        %v566 = vpop.f32.mrf.mxu0
        %v567 = vadd.f32 0.0, %v566
        %v568 = vpop.f32.mrf.mxu0
        %v569 = vadd.f32 0.0, %v568
        %570 = vmatmul.bf16.gmra.mxu0 %v446
        %v571 = vpop.f32.mrf.mxu0
        %v572 = vadd.f32 0.0, %v571
        %v573 = vpop.f32.mrf.mxu0
        %v574 = vadd.f32 0.0, %v573
        %575 = vmatmul.bf16.gmra.mxu0 %v447
        %v576 = vpop.f32.mrf.mxu0
        %v577 = vadd.f32 0.0, %v576
        %v578 = vpop.f32.mrf.mxu0
        %v579 = vadd.f32 0.0, %v578
        %580 = vmatmul.bf16.gmra.mxu0 %v448
        %v581 = vpop.f32.mrf.mxu0
        %v582 = vadd.f32 0.0, %v581
        %v583 = vpop.f32.mrf.mxu0
        %v584 = vadd.f32 0.0, %v583
        %585 = vmatmul.bf16.gmra.mxu0 %v449
        %v586 = vpop.f32.mrf.mxu0
        %v587 = vadd.f32 0.0, %v586
        %v588 = vpop.f32.mrf.mxu0
        %v589 = vadd.f32 0.0, %v588
        %590 = vmatmul.bf16.gmra.mxu0 %v450
        %v591 = vpop.f32.mrf.mxu0
        %v592 = vadd.f32 0.0, %v591
        %v593 = vpop.f32.mrf.mxu0
        %v594 = vadd.f32 0.0, %v593
        %595 = vmatmul.bf16.gmra.mxu0 %v451
        %v596 = vpop.f32.mrf.mxu0
        %v597 = vadd.f32 0.0, %v596
        %v598 = vpop.f32.mrf.mxu0
        %v599 = vadd.f32 0.0, %v598
        %600 = vmatmul.bf16.gmra.mxu0 %v452
        %v601 = vpop.f32.mrf.mxu0
        %v602 = vadd.f32 0.0, %v601
        %v603 = vpop.f32.mrf.mxu0
        %v604 = vadd.f32 0.0, %v603
        %605 = vmatmul.bf16.gmra.mxu0 %v453
        %v606 = vpop.f32.mrf.mxu0
        %v607 = vadd.f32 0.0, %v606
        %v608 = vpop.f32.mrf.mxu0
        %v609 = vadd.f32 0.0, %v608
        %610 = vmatmul.bf16.gmra.mxu0 %v454
        %v611 = vpop.f32.mrf.mxu0
        %v612 = vadd.f32 0.0, %v611
        %v613 = vpop.f32.mrf.mxu0
        %v614 = vadd.f32 0.0, %v613
        %615 = vmatmul.bf16.gmra.mxu0 %v455
        %v616 = vpop.f32.mrf.mxu0
        %v617 = vadd.f32 0.0, %v616
        %v618 = vpop.f32.mrf.mxu0
        %v619 = vadd.f32 0.0, %v618
        %620 = vmatmul.bf16.gmra.mxu0 %v456
        %v621 = vpop.f32.mrf.mxu0
        %v622 = vadd.f32 0.0, %v621
        %v623 = vpop.f32.mrf.mxu0
        %v624 = vadd.f32 0.0, %v623
        %625 = vmatmul.bf16.gmra.mxu0 %v457
        %v626 = vpop.f32.mrf.mxu0
        %v627 = vadd.f32 0.0, %v626
        %v628 = vpop.f32.mrf.mxu0
        %v629 = vadd.f32 0.0, %v628
        %630 = vmatmul.bf16.gmra.mxu0 %v458
        %v631 = vpop.f32.mrf.mxu0
        %v632 = vadd.f32 0.0, %v631
        %v633 = vpop.f32.mrf.mxu0
        %v634 = vadd.f32 0.0, %v633
        %635 = vmatmul.bf16.gmra.mxu0 %v459
        %v636 = vpop.f32.mrf.mxu0
        %v637 = vadd.f32 0.0, %v636
        %v638 = vpop.f32.mrf.mxu0
        %v639 = vadd.f32 0.0, %v638
        %640 = vmatmul.bf16.gmra.mxu0 %v460
        %v641 = vpop.f32.mrf.mxu0
        %v642 = vadd.f32 0.0, %v641
        %v643 = vpop.f32.mrf.mxu0
        %v644 = vadd.f32 0.0, %v643
        %645 = vmatmul.bf16.gmra.mxu0 %v461
        %v646 = vpop.f32.mrf.mxu0
        %v647 = vadd.f32 0.0, %v646
        %v648 = vpop.f32.mrf.mxu0
        %v649 = vadd.f32 0.0, %v648
        %650 = vmatmul.bf16.gmra.mxu0 %v462
        %v651 = vpop.f32.mrf.mxu0
        %v652 = vadd.f32 0.0, %v651
        %v653 = vpop.f32.mrf.mxu0
        %v654 = vadd.f32 0.0, %v653
        %655 = vmatmul.bf16.gmra.mxu0 %v463
        %v656 = vpop.f32.mrf.mxu0
        %v657 = vadd.f32 0.0, %v656
        %v658 = vpop.f32.mrf.mxu0
        %v659 = vadd.f32 0.0, %v658
        %660 = vmatmul.bf16.gmra.mxu0 %v464
        %v661 = vpop.f32.mrf.mxu0
        %v662 = vadd.f32 0.0, %v661
        %v663 = vpop.f32.mrf.mxu0
        %v664 = vadd.f32 0.0, %v663
        %665 = vmatmul.bf16.gmra.mxu0 %v465
        %v666 = vpop.f32.mrf.mxu0
        %v667 = vadd.f32 0.0, %v666
        %v668 = vpop.f32.mrf.mxu0
        %v669 = vadd.f32 0.0, %v668
        %670 = vmatmul.bf16.gmra.mxu0 %v466
        %v671 = vpop.f32.mrf.mxu0
        %v672 = vadd.f32 0.0, %v671
        %v673 = vpop.f32.mrf.mxu0
        %v674 = vadd.f32 0.0, %v673
        %675 = vmatmul.bf16.gmra.mxu0 %v467
        %v676 = vpop.f32.mrf.mxu0
        %v677 = vadd.f32 0.0, %v676
        %v678 = vpop.f32.mrf.mxu0
        %v679 = vadd.f32 0.0, %v678
        %680 = vmatmul.bf16.gmra.mxu0 %v468
        %v681 = vpop.f32.mrf.mxu0
        %v682 = vadd.f32 0.0, %v681
        %v683 = vpop.f32.mrf.mxu0
        %v684 = vadd.f32 0.0, %v683
        %685 = vmatmul.bf16.gmra.mxu0 %v469
        %v686 = vpop.f32.mrf.mxu0
        %v687 = vadd.f32 0.0, %v686
        %v688 = vpop.f32.mrf.mxu0
        %v689 = vadd.f32 0.0, %v688
        %690 = vmatmul.bf16.gmra.mxu0 %v470
        %v691 = vpop.f32.mrf.mxu0
        %v692 = vadd.f32 0.0, %v691
        %v693 = vpop.f32.mrf.mxu0
        %v694 = vadd.f32 0.0, %v693
        %695 = vmatmul.bf16.gmra.mxu0 %v471
        %v696 = vpop.f32.mrf.mxu0
        %v697 = vadd.f32 0.0, %v696
        %v698 = vpop.f32.mrf.mxu0
        %v699 = vadd.f32 0.0, %v698
        %700 = vmatmul.bf16.gmra.mxu0 %v472
        %v701 = vpop.f32.mrf.mxu0
        %v702 = vadd.f32 0.0, %v701
        %v703 = vpop.f32.mrf.mxu0
        %v704 = vadd.f32 0.0, %v703
        %705 = vmatmul.bf16.gmra.mxu0 %v473
        %v706 = vpop.f32.mrf.mxu0
        %v707 = vadd.f32 0.0, %v706
        %v708 = vpop.f32.mrf.mxu0
        %v709 = vadd.f32 0.0, %v708
        %710 = vmatmul.bf16.gmra.mxu0 %v474
        %v711 = vpop.f32.mrf.mxu0
        %v712 = vadd.f32 0.0, %v711
        %v713 = vpop.f32.mrf.mxu0
        %v714 = vadd.f32 0.0, %v713
        %715 = vmatmul.bf16.gmra.mxu0 %v475
        %v716 = vpop.f32.mrf.mxu0
        %v717 = vadd.f32 0.0, %v716
        %v718 = vpop.f32.mrf.mxu0
        %v719 = vadd.f32 0.0, %v718
        %720 = vmatmul.bf16.gmra.mxu0 %v476
        %v721 = vpop.f32.mrf.mxu0
        %v722 = vadd.f32 0.0, %v721
        %v723 = vpop.f32.mrf.mxu0
        %v724 = vadd.f32 0.0, %v723
        %725 = vdwg.mxu0
        %v726 = vld [vmem:[%s2] sm:$0x1]
        %v728 = vperm.slane %v726, 0
        %v730 = vmul.f32 %v567, %v728
        %v731 = vmul.f32 %v569, %v728
        %v732 = vmul.f32 %v572, %v728
        %v733 = vmul.f32 %v574, %v728
        %v734 = vmul.f32 %v577, %v728
        %v735 = vmul.f32 %v579, %v728
        %v736 = vmul.f32 %v582, %v728
        %v737 = vmul.f32 %v584, %v728
        %v738 = vmul.f32 %v587, %v728
        %v739 = vmul.f32 %v589, %v728
        %v740 = vmul.f32 %v592, %v728
        %v741 = vmul.f32 %v594, %v728
        %v742 = vmul.f32 %v597, %v728
        %v743 = vmul.f32 %v599, %v728
        %v744 = vmul.f32 %v602, %v728
        %v745 = vmul.f32 %v604, %v728
        %v746 = vmul.f32 %v607, %v728
        %v747 = vmul.f32 %v609, %v728
        %v748 = vmul.f32 %v612, %v728
        %v749 = vmul.f32 %v614, %v728
        %v750 = vmul.f32 %v617, %v728
        %v751 = vmul.f32 %v619, %v728
        %v752 = vmul.f32 %v622, %v728
        %v753 = vmul.f32 %v624, %v728
        %v754 = vmul.f32 %v627, %v728
        %v755 = vmul.f32 %v629, %v728
        %v756 = vmul.f32 %v632, %v728
        %v757 = vmul.f32 %v634, %v728
        %v758 = vmul.f32 %v637, %v728
        %v759 = vmul.f32 %v639, %v728
        %v760 = vmul.f32 %v642, %v728
        %v761 = vmul.f32 %v644, %v728
        %v762 = vmul.f32 %v647, %v728
        %v763 = vmul.f32 %v649, %v728
        %v764 = vmul.f32 %v652, %v728
        %v765 = vmul.f32 %v654, %v728
        %v766 = vmul.f32 %v657, %v728
        %v767 = vmul.f32 %v659, %v728
        %v768 = vmul.f32 %v662, %v728
        %v769 = vmul.f32 %v664, %v728
        %v770 = vmul.f32 %v667, %v728
        %v771 = vmul.f32 %v669, %v728
        %v772 = vmul.f32 %v672, %v728
        %v773 = vmul.f32 %v674, %v728
        %v774 = vmul.f32 %v677, %v728
        %v775 = vmul.f32 %v679, %v728
        %v776 = vmul.f32 %v682, %v728
        %v777 = vmul.f32 %v684, %v728
        %v778 = vmul.f32 %v687, %v728
        %v779 = vmul.f32 %v689, %v728
        %v780 = vmul.f32 %v692, %v728
        %v781 = vmul.f32 %v694, %v728
        %v782 = vmul.f32 %v697, %v728
        %v783 = vmul.f32 %v699, %v728
        %v784 = vmul.f32 %v702, %v728
        %v785 = vmul.f32 %v704, %v728
        %v786 = vmul.f32 %v707, %v728
        %v787 = vmul.f32 %v709, %v728
        %v788 = vmul.f32 %v712, %v728
        %v789 = vmul.f32 %v714, %v728
        %v790 = vmul.f32 %v717, %v728
        %v791 = vmul.f32 %v719, %v728
        %v792 = vmul.f32 %v722, %v728
        %v793 = vmul.f32 %v724, %v728
        %v794 = vld [vmem:[%s3] sm:$0x1]
        %v796 = vperm.slane %v794, 0
        %v798 = vadd.f32 %v730, %v796
        %v799 = vadd.f32 %v731, %v796
        %v800 = vadd.f32 %v732, %v796
        %v801 = vadd.f32 %v733, %v796
        %v802 = vadd.f32 %v734, %v796
        %v803 = vadd.f32 %v735, %v796
        %v804 = vadd.f32 %v736, %v796
        %v805 = vadd.f32 %v737, %v796
        %v806 = vadd.f32 %v738, %v796
        %v807 = vadd.f32 %v739, %v796
        %v808 = vadd.f32 %v740, %v796
        %v809 = vadd.f32 %v741, %v796
        %v810 = vadd.f32 %v742, %v796
        %v811 = vadd.f32 %v743, %v796
        %v812 = vadd.f32 %v744, %v796
        %v813 = vadd.f32 %v745, %v796
        %v814 = vadd.f32 %v746, %v796
        %v815 = vadd.f32 %v747, %v796
        %v816 = vadd.f32 %v748, %v796
        %v817 = vadd.f32 %v749, %v796
        %v818 = vadd.f32 %v750, %v796
        %v819 = vadd.f32 %v751, %v796
        %v820 = vadd.f32 %v752, %v796
        %v821 = vadd.f32 %v753, %v796
        %v822 = vadd.f32 %v754, %v796
        %v823 = vadd.f32 %v755, %v796
        %v824 = vadd.f32 %v756, %v796
        %v825 = vadd.f32 %v757, %v796
        %v826 = vadd.f32 %v758, %v796
        %v827 = vadd.f32 %v759, %v796
        %v828 = vadd.f32 %v760, %v796
        %v829 = vadd.f32 %v761, %v796
        %v830 = vadd.f32 %v762, %v796
        %v831 = vadd.f32 %v763, %v796
        %v832 = vadd.f32 %v764, %v796
        %v833 = vadd.f32 %v765, %v796
        %v834 = vadd.f32 %v766, %v796
        %v835 = vadd.f32 %v767, %v796
        %v836 = vadd.f32 %v768, %v796
        %v837 = vadd.f32 %v769, %v796
        %v838 = vadd.f32 %v770, %v796
        %v839 = vadd.f32 %v771, %v796
        %v840 = vadd.f32 %v772, %v796
        %v841 = vadd.f32 %v773, %v796
        %v842 = vadd.f32 %v774, %v796
        %v843 = vadd.f32 %v775, %v796
        %v844 = vadd.f32 %v776, %v796
        %v845 = vadd.f32 %v777, %v796
        %v846 = vadd.f32 %v778, %v796
        %v847 = vadd.f32 %v779, %v796
        %v848 = vadd.f32 %v780, %v796
        %v849 = vadd.f32 %v781, %v796
        %v850 = vadd.f32 %v782, %v796
        %v851 = vadd.f32 %v783, %v796
        %v852 = vadd.f32 %v784, %v796
        %v853 = vadd.f32 %v785, %v796
        %v854 = vadd.f32 %v786, %v796
        %v855 = vadd.f32 %v787, %v796
        %v856 = vadd.f32 %v788, %v796
        %v857 = vadd.f32 %v789, %v796
        %v858 = vadd.f32 %v790, %v796
        %v859 = vadd.f32 %v791, %v796
        %v860 = vadd.f32 %v792, %v796
        %v861 = vadd.f32 %v793, %v796
        %v862 = vpack.c.bf16 %v798, %v798
        %v863 = vpack.c.bf16 %v799, %v799
        %v864 = vpack.c.bf16 %v800, %v800
        %v865 = vpack.c.bf16 %v801, %v801
        %v866 = vpack.c.bf16 %v802, %v802
        %v867 = vpack.c.bf16 %v803, %v803
        %v868 = vpack.c.bf16 %v804, %v804
        %v869 = vpack.c.bf16 %v805, %v805
        %v870 = vpack.c.bf16 %v806, %v806
        %v871 = vpack.c.bf16 %v807, %v807
        %v872 = vpack.c.bf16 %v808, %v808
        %v873 = vpack.c.bf16 %v809, %v809
        %v874 = vpack.c.bf16 %v810, %v810
        %v875 = vpack.c.bf16 %v811, %v811
        %v876 = vpack.c.bf16 %v812, %v812
        %v877 = vpack.c.bf16 %v813, %v813
        %v878 = vpack.c.bf16 %v814, %v814
        %v879 = vpack.c.bf16 %v815, %v815
        %v880 = vpack.c.bf16 %v816, %v816
        %v881 = vpack.c.bf16 %v817, %v817
        %v882 = vpack.c.bf16 %v818, %v818
        %v883 = vpack.c.bf16 %v819, %v819
        %v884 = vpack.c.bf16 %v820, %v820
        %v885 = vpack.c.bf16 %v821, %v821
        %v886 = vpack.c.bf16 %v822, %v822
        %v887 = vpack.c.bf16 %v823, %v823
        %v888 = vpack.c.bf16 %v824, %v824
        %v889 = vpack.c.bf16 %v825, %v825
        %v890 = vpack.c.bf16 %v826, %v826
        %v891 = vpack.c.bf16 %v827, %v827
        %v892 = vpack.c.bf16 %v828, %v828
        %v893 = vpack.c.bf16 %v829, %v829
        %v894 = vpack.c.bf16 %v830, %v830
        %v895 = vpack.c.bf16 %v831, %v831
        %v896 = vpack.c.bf16 %v832, %v832
        %v897 = vpack.c.bf16 %v833, %v833
        %v898 = vpack.c.bf16 %v834, %v834
        %v899 = vpack.c.bf16 %v835, %v835
        %v900 = vpack.c.bf16 %v836, %v836
        %v901 = vpack.c.bf16 %v837, %v837
        %v902 = vpack.c.bf16 %v838, %v838
        %v903 = vpack.c.bf16 %v839, %v839
        %v904 = vpack.c.bf16 %v840, %v840
        %v905 = vpack.c.bf16 %v841, %v841
        %v906 = vpack.c.bf16 %v842, %v842
        %v907 = vpack.c.bf16 %v843, %v843
        %v908 = vpack.c.bf16 %v844, %v844
        %v909 = vpack.c.bf16 %v845, %v845
        %v910 = vpack.c.bf16 %v846, %v846
        %v911 = vpack.c.bf16 %v847, %v847
        %v912 = vpack.c.bf16 %v848, %v848
        %v913 = vpack.c.bf16 %v849, %v849
        %v914 = vpack.c.bf16 %v850, %v850
        %v915 = vpack.c.bf16 %v851, %v851
        %v916 = vpack.c.bf16 %v852, %v852
        %v917 = vpack.c.bf16 %v853, %v853
        %v918 = vpack.c.bf16 %v854, %v854
        %v919 = vpack.c.bf16 %v855, %v855
        %v920 = vpack.c.bf16 %v856, %v856
        %v921 = vpack.c.bf16 %v857, %v857
        %v922 = vpack.c.bf16 %v858, %v858
        %v923 = vpack.c.bf16 %v859, %v859
        %v924 = vpack.c.bf16 %v860, %v860
        %v925 = vpack.c.bf16 %v861, %v861
        %926 = vst [vmem:[%s234] sm:$0xf] %v862
        %927 = vst [vmem:[%s234 + $0x4] sm:$0xf] %v863
        %928 = vst [vmem:[%s234 + $0x8] sm:$0xf] %v864
        %929 = vst [vmem:[%s234 + $0xc] sm:$0xf] %v865
        %930 = vst [vmem:[%s234 + $0x10] sm:$0xf] %v866
        %931 = vst [vmem:[%s234 + $0x14] sm:$0xf] %v867
        %932 = vst [vmem:[%s234 + $0x18] sm:$0xf] %v868
        %933 = vst [vmem:[%s234 + $0x1c] sm:$0xf] %v869
        %934 = vst [vmem:[%s234 + $0x20] sm:$0xf] %v870
        %935 = vst [vmem:[%s234 + $0x24] sm:$0xf] %v871
        %936 = vst [vmem:[%s234 + $0x28] sm:$0xf] %v872
        %937 = vst [vmem:[%s234 + $0x2c] sm:$0xf] %v873
        %938 = vst [vmem:[%s234 + $0x30] sm:$0xf] %v874
        %939 = vst [vmem:[%s234 + $0x34] sm:$0xf] %v875
        %940 = vst [vmem:[%s234 + $0x38] sm:$0xf] %v876
        %941 = vst [vmem:[%s234 + $0x3c] sm:$0xf] %v877
        %942 = vst [vmem:[%s234 + $0x40] sm:$0xf] %v878
        %943 = vst [vmem:[%s234 + $0x44] sm:$0xf] %v879
        %944 = vst [vmem:[%s234 + $0x48] sm:$0xf] %v880
        %945 = vst [vmem:[%s234 + $0x4c] sm:$0xf] %v881
        %946 = vst [vmem:[%s234 + $0x50] sm:$0xf] %v882
        %947 = vst [vmem:[%s234 + $0x54] sm:$0xf] %v883
        %948 = vst [vmem:[%s234 + $0x58] sm:$0xf] %v884
        %949 = vst [vmem:[%s234 + $0x5c] sm:$0xf] %v885
        %950 = vst [vmem:[%s234 + $0x60] sm:$0xf] %v886
        %951 = vst [vmem:[%s234 + $0x64] sm:$0xf] %v887
        %952 = vst [vmem:[%s234 + $0x68] sm:$0xf] %v888
        %953 = vst [vmem:[%s234 + $0x6c] sm:$0xf] %v889
        %954 = vst [vmem:[%s234 + $0x70] sm:$0xf] %v890
        %955 = vst [vmem:[%s234 + $0x74] sm:$0xf] %v891
        %956 = vst [vmem:[%s234 + $0x78] sm:$0xf] %v892
        %957 = vst [vmem:[%s234 + $0x7c] sm:$0xf] %v893
        %958 = vst [vmem:[%s234 + $0x80] sm:$0xf] %v894
        %959 = vst [vmem:[%s234 + $0x84] sm:$0xf] %v895
        %960 = vst [vmem:[%s234 + $0x88] sm:$0xf] %v896
        %961 = vst [vmem:[%s234 + $0x8c] sm:$0xf] %v897
        %962 = vst [vmem:[%s234 + $0x90] sm:$0xf] %v898
        %963 = vst [vmem:[%s234 + $0x94] sm:$0xf] %v899
        %964 = vst [vmem:[%s234 + $0x98] sm:$0xf] %v900
        %965 = vst [vmem:[%s234 + $0x9c] sm:$0xf] %v901
        %966 = vst [vmem:[%s234 + $0xa0] sm:$0xf] %v902
        %967 = vst [vmem:[%s234 + $0xa4] sm:$0xf] %v903
        %968 = vst [vmem:[%s234 + $0xa8] sm:$0xf] %v904
        %969 = vst [vmem:[%s234 + $0xac] sm:$0xf] %v905
        %970 = vst [vmem:[%s234 + $0xb0] sm:$0xf] %v906
        %971 = vst [vmem:[%s234 + $0xb4] sm:$0xf] %v907
        %972 = vst [vmem:[%s234 + $0xb8] sm:$0xf] %v908
        %973 = vst [vmem:[%s234 + $0xbc] sm:$0xf] %v909
        %974 = vst [vmem:[%s234 + $0xc0] sm:$0xf] %v910
        %975 = vst [vmem:[%s234 + $0xc4] sm:$0xf] %v911
        %976 = vst [vmem:[%s234 + $0xc8] sm:$0xf] %v912
        %977 = vst [vmem:[%s234 + $0xcc] sm:$0xf] %v913
        %978 = vst [vmem:[%s234 + $0xd0] sm:$0xf] %v914
        %979 = vst [vmem:[%s234 + $0xd4] sm:$0xf] %v915
        %980 = vst [vmem:[%s234 + $0xd8] sm:$0xf] %v916
        %981 = vst [vmem:[%s234 + $0xdc] sm:$0xf] %v917
        %982 = vst [vmem:[%s234 + $0xe0] sm:$0xf] %v918
        %983 = vst [vmem:[%s234 + $0xe4] sm:$0xf] %v919
        %984 = vst [vmem:[%s234 + $0xe8] sm:$0xf] %v920
        %985 = vst [vmem:[%s234 + $0xec] sm:$0xf] %v921
        %986 = vst [vmem:[%s234 + $0xf0] sm:$0xf] %v922
        %987 = vst [vmem:[%s234 + $0xf4] sm:$0xf] %v923
        %988 = vst [vmem:[%s234 + $0xf8] sm:$0xf] %v924
        %989 = vst [vmem:[%s234 + $0xfc] sm:$0xf] %v925
        %s990 = sand.u32 %s119, 1
        %s991 = scalar_lea.sflag [#allocation4], %s990
        %s992 = sand.u32 %s119, 1
        %s993 = smul.addr %s992, 256
        %s994 = scalar_lea.vmem [#allocation7], %s993
        // Predicated region
        $region45: #{tpu_custom_call.1} parent=35 // pred_check
          %p995 = pneg %p129
        $region46: #{tpu_custom_call.1} parent=35 // pred_check_branch
          %997 = sbr.rel (%p995) target = $region48
        $region47: #{tpu_custom_call.1} parent=35 // pred_region
          %s998 = smul.u32 64, %s22
          %1000 = vsyncadd %s991, 0
          %s1001 = smul.addr %s998, 4
          %s1002 = scalar_lea.hbm %s4, %s1001
          %s1003 = sshll.u32 %s994, 4
          %s1004 = int_to_ptr.vmem [resolvable:$true] %s1003
          %s1005 = sshll.u32 %s1002, 4
          %s1006 = int_to_ptr.hbm [resolvable:$true] %s1005
          %1011 = dma.vmem_to_hbm [thread:$0]  %s1004, 4096, %s1006, %s991, 64, 64, 4
        $region48: #{tpu_custom_call.1} parent=35 // pred_fallthru
          _
      $region36: #{tpu_custom_call.1} parent=5 // pred_fallthru
        _
      %p1012 = scmp.le.s32.totalorder 2, %s17
      // Predicated region
      $region49: #{tpu_custom_call.1} parent=5 // pred_check
        %p1013 = pneg %p1012
      $region50: #{tpu_custom_call.1} parent=5 // pred_check_branch
        %1015 = sbr.rel (%p1013) target = $region52
      $region51: #{tpu_custom_call.1} parent=5 // pred_region
        %s1016 = ssub.s32 %s17, 2
        // Predicated region
        $region53: #{tpu_custom_call.1} parent=51 // pred_check
          %p1017 = pneg %p135
        $region54: #{tpu_custom_call.1} parent=51 // pred_check_branch
          %1019 = sbr.rel (%p1017) target = $region56
        $region55: #{tpu_custom_call.1} parent=51 // pred_region
          %s1020 = sand.u32 %s120, 1
          %s1021 = scalar_lea.sflag [#allocation4], %s1020
          %s1022 = sand.u32 %s120, 1
          %s1023 = smul.addr %s1022, 256
          %s1024 = scalar_lea.vmem [#allocation7], %s1023
          %1026 = dma.done %s1021, 4096
        $region56: #{tpu_custom_call.1} parent=51 // pred_fallthru
          _
      $region52: #{tpu_custom_call.1} parent=5 // pred_fallthru
        _
    $region6: #{tpu_custom_call.1} parent=1 // loop_footer
      %s21 = sadd.s32 1, %s17
    $region7: #{tpu_custom_call.1} parent=1 // loop_footer_branch
      %16 = sbr.rel target = $region3
    $region8: #{tpu_custom_call.1} parent=1 // loop_exit
      _
    %1027 = vsyncpa [#allocation3], 1
    %s1028 = scalar_lea.sflag [#allocation3], 1
    %1029 = vsyncpa %s1028, 1
    %1030 = vsyncpa [#allocation6], 1
    %1031 = vsyncpa [#allocation4], 1
    %s1032 = scalar_lea.sflag [#allocation4], 1
    %1033 = vsyncpa %s1032, 1

</llo_original>
